<compile_context>
chip_gen: v7x
topology: tpu7x:2x2x1
jax: 0.10.0
libtpu: 0.0.40
codegen_flags: <defaults>
</compile_context>

<pallas_src>
import jax
import jax.numpy as jnp
from jax.experimental import pallas as pl
from jax.experimental.pallas import tpu as pltpu


def _flash_self_attn_kernel(xq_ref, xkv_ref, wq_ref, wkv_ref, o_ref,
                            q_sc, m_sc, l_sc, acc_sc):
    """One (batch, q-tile, kv-tile) grid step of fused projection + attention.

    xq_ref : (tq, Dp)    x rows for this query tile (batch dim squeezed)
    xkv_ref: (tk, Dp)    x rows for this key/value tile
    wq_ref : (Dp, Dp)    query projection (resident)
    wkv_ref: (Dp, 2*Dp)  fused [W_k | W_v] projection (resident)
    o_ref  : (tq, Dp)    output tile (resident across the kv axis)
    q_sc   : (tq, Dp)    projected queries, computed once per q tile
    m_sc, l_sc : (tq, 1) f32 online-softmax running max / running sum
    acc_sc : (tq, Dp)    f32 output accumulator
    """
    kv = pl.program_id(2)
    Dp = wq_ref.shape[1]
    cdt = xq_ref.dtype  # native compute dtype for MXU operands

    @pl.when(kv == 0)
    def _init():
        q_sc[...] = jnp.dot(
            xq_ref[...], wq_ref[...],
            preferred_element_type=jnp.float32).astype(cdt)
        m_sc[...] = jnp.full_like(m_sc, -jnp.inf)
        l_sc[...] = jnp.zeros_like(l_sc)
        acc_sc[...] = jnp.zeros_like(acc_sc)

    # Fused K/V projection for this kv tile: one (tk, Dp) x (Dp, 2*Dp) matmul.
    kvp = jnp.dot(xkv_ref[...], wkv_ref[...],
                  preferred_element_type=jnp.float32)            # (tk, 2*Dp)
    k = kvp[:, :Dp].astype(cdt)
    v = kvp[:, Dp:].astype(cdt)

    # scores = Q . K^T, contracting the last dim of both (no explicit k.T).
    s = jax.lax.dot_general(
        q_sc[...], k,
        dimension_numbers=(((1,), (1,)), ((), ())),
        preferred_element_type=jnp.float32)                      # (tq, tk) f32
    # NOTE: no 1/sqrt(D) scaling -- matches the reference module.

    # Online softmax update (all running state in f32).
    m_prev = m_sc[...]
    m_new = jnp.maximum(m_prev, jnp.max(s, axis=-1, keepdims=True))
    alpha = jnp.exp(m_prev - m_new)
    p = jnp.exp(s - m_new)                                       # (tq, tk) f32
    l_sc[...] = alpha * l_sc[...] + jnp.sum(p, axis=-1, keepdims=True)
    acc_sc[...] = alpha * acc_sc[...] + jnp.dot(
        p.astype(cdt), v, preferred_element_type=jnp.float32)
    m_sc[...] = m_new

    @pl.when(kv == pl.num_programs(2) - 1)
    def _finalize():
        inv_l = pl.reciprocal(l_sc[...], approx=True)
        o_ref[...] = (acc_sc[...] * inv_l).astype(o_ref.dtype)


def _round_up(x, m):
    return ((x + m - 1) // m) * m


def _pick_tile(T, cap):
    """Largest multiple of 8 that divides T and is <= cap (or T itself)."""
    if T <= cap:
        return T
    for t in range(cap, 7, -8):
        if T % t == 0:
            return t
    return T  # fallback: single full-extent block


def self_attention_pallas(x, w_k, w_q, w_v):
    """out = softmax((x W_q)(x W_k)^T, axis=-1) @ (x W_v)  (no sqrt(D) scale)."""
    B, T, D = x.shape
    dt = x.dtype
    Dp = _round_up(D, 128)           # lane-dense feature dim
    tq = _pick_tile(T, 256)
    tk = _pick_tile(T, 512)
    nq, nk = T // tq, T // tk

    # Zero-pad the feature dim. Safe: padded columns contribute 0 to every
    # matmul and the padded output columns are sliced off below.
    if Dp != D:
        x = jnp.pad(x, ((0, 0), (0, 0), (0, Dp - D)))
        pad_w = lambda w: jnp.pad(w, ((0, Dp - D), (0, Dp - D)))
        w_k, w_q, w_v = pad_w(w_k), pad_w(w_q), pad_w(w_v)
    w_q = w_q.astype(dt)
    w_kv = jnp.concatenate([w_k, w_v], axis=1).astype(dt)        # (Dp, 2*Dp)

    itemsize = jnp.dtype(dt).itemsize
    # Rough VMEM need: double-buffered inputs/output + scratch, with headroom,
    # clamped so it stays valid on v7x's smaller (64 MiB) VMEM.
    vmem_need = (2 * (tq * Dp + tk * Dp + Dp * Dp + 2 * Dp * Dp + tq * Dp)
                 * itemsize
                 + tq * Dp * itemsize + 2 * tq * 4 + tq * Dp * 4)
    vmem_limit = int(min(max(2 * vmem_need, 16 * 1024 * 1024),
                         48 * 1024 * 1024))

    cost = pl.CostEstimate(
        flops=int(2 * B * T * Dp * 3 * Dp + 4 * B * T * T * Dp),
        transcendentals=int(B * T * T),
        bytes_accessed=int((2 * B * T * Dp + 3 * Dp * Dp + B * T * Dp)
                           * itemsize),
    )

    out = pl.pallas_call(
        _flash_self_attn_kernel,
        out_shape=jax.ShapeDtypeStruct((B, T, Dp), dt),
        grid_spec=pltpu.PrefetchScalarGridSpec(
            num_scalar_prefetch=0,
            grid=(B, nq, nk),
            in_specs=[
                # x, query-tile view (constant across the kv axis -> resident).
                pl.BlockSpec((pl.Squeezed(), tq, Dp),
                             lambda b, qi, ki: (b, qi, 0)),
                # x, key/value-tile view.
                pl.BlockSpec((pl.Squeezed(), tk, Dp),
                             lambda b, qi, ki: (b, ki, 0)),
                # W_q and fused [W_k | W_v], resident for the whole grid.
                pl.BlockSpec((Dp, Dp), lambda b, qi, ki: (0, 0)),
                pl.BlockSpec((Dp, 2 * Dp), lambda b, qi, ki: (0, 0)),
            ],
            out_specs=pl.BlockSpec((pl.Squeezed(), tq, Dp),
                                   lambda b, qi, ki: (b, qi, 0)),
            scratch_shapes=[
                pltpu.VMEM((tq, Dp), dt),            # projected Q
                pltpu.VMEM((tq, 1), jnp.float32),    # running max
                pltpu.VMEM((tq, 1), jnp.float32),    # running sum
                pltpu.VMEM((tq, Dp), jnp.float32),   # output accumulator
            ],
        ),
        compiler_params=pltpu.CompilerParams(
            dimension_semantics=("parallel", "parallel", "arbitrary"),
            vmem_limit_bytes=vmem_limit,
        ),
        cost_estimate=cost,
    )(x, x, w_q, w_kv)

    return out[:, :, :D]


def self_attention_ref(x, w_k, w_q, w_v):
    k = jnp.einsum('btd,dk->btk', x, w_k)
    q = jnp.einsum('btd,dq->btq', x, w_q)
    v = jnp.einsum('btd,dv->btv', x, w_v)
    s = jnp.einsum('bqd,bkd->bqk', q, k)
    p = jax.nn.softmax(s, axis=2)
    return jnp.einsum('bta,bav->btv', p, v)


if __name__ == "__main__":
    B, T, D = 2, 8, 32
    key = jax.random.PRNGKey(0)
    kx, kk, kq, kv = jax.random.split(key, 4)

    x = jax.random.normal(kx, (B, T, D), dtype=jnp.float32)

    # Deterministic xavier_normal_(gain=0.002): std = gain*sqrt(2/(fan_in+fan_out))
    std = 0.002 * (2.0 / (D + D)) ** 0.5
    w_k = std * jax.random.normal(kk, (D, D), dtype=jnp.float32)
    w_q = std * jax.random.normal(kq, (D, D), dtype=jnp.float32)
    w_v = std * jax.random.normal(kv, (D, D), dtype=jnp.float32)

    out = jax.block_until_ready(self_attention_pallas(x, w_k, w_q, w_v))
    ref = self_attention_ref(x, w_k, w_q, w_v)

    assert out.shape == (B, T, D)
    # Tolerance loosened slightly for the approx (EUP) reciprocal in finalize.
    assert jnp.allclose(out, ref, atol=1e-4, rtol=1e-2), (
        f"mismatch vs reference, max abs err {jnp.max(jnp.abs(out - ref))}")
    print("KERNEL_OK")
</pallas_src>

<mosaic_0001>
module attributes {stable_mosaic.version = 11 : i64} {
  func.func @_flash_self_attn_kernel(%arg0: i32, %arg1: i32, %arg2: i32, %arg3: memref<1x8x128xf32, #tpu.memory_space<vmem>>, %arg4: memref<1x8x128xf32, #tpu.memory_space<vmem>>, %arg5: memref<128x128xf32, #tpu.memory_space<vmem>>, %arg6: memref<128x256xf32, #tpu.memory_space<vmem>>, %arg7: memref<1x8x128xf32, #tpu.memory_space<vmem>>, %arg8: memref<8x128xf32, #tpu.memory_space<vmem>>, %arg9: memref<8x1xf32, #tpu.memory_space<vmem>>, %arg10: memref<8x1xf32, #tpu.memory_space<vmem>>, %arg11: memref<8x128xf32, #tpu.memory_space<vmem>>) attributes {dimension_semantics = [#tpu.dimension_semantics<parallel>, #tpu.dimension_semantics<parallel>, #tpu.dimension_semantics<arbitrary>], iteration_bounds = array<i64: 2, 1, 1>, scalar_prefetch = 0 : i64, scratch_operands = 4 : i64, tpu.core_type = #tpu.core_type<tc>, window_params = [{transform_indices = @transform_0, window_bounds = array<i64: 1, 8, 128>}, {transform_indices = @transform_1, window_bounds = array<i64: 1, 8, 128>}, {pipeline_mode = #tpu.pipeline_mode<synchronous>, transform_indices = @transform_2, window_bounds = array<i64: 128, 128>}, {pipeline_mode = #tpu.pipeline_mode<synchronous>, transform_indices = @transform_3, window_bounds = array<i64: 128, 256>}, {transform_indices = @transform_4, window_bounds = array<i64: 1, 8, 128>}]} {
    %c0_i32 = arith.constant 0 : i32
    %0 = arith.cmpi eq, %arg2, %c0_i32 : i32
    %1 = arith.extui %0 : i1 to i32
    %c0_i32_0 = arith.constant 0 : i32
    %2 = arith.cmpi ne, %1, %c0_i32_0 : i32
    scf.if %2 {
      %c0_25 = arith.constant 0 : index
      %c0_26 = arith.constant 0 : index
      %c0_27 = arith.constant 0 : index
      %36 = vector.load %arg3[%c0_25, %c0_26, %c0_27] : memref<1x8x128xf32, #tpu.memory_space<vmem>>, vector<1x8x128xf32>
      %37 = vector.shape_cast %36 : vector<1x8x128xf32> to vector<8x128xf32>
      %c0_28 = arith.constant 0 : index
      %c0_29 = arith.constant 0 : index
      %38 = vector.load %arg5[%c0_28, %c0_29] : memref<128x128xf32, #tpu.memory_space<vmem>>, vector<128x128xf32>
      %cst_30 = arith.constant dense<0.000000e+00> : vector<8x128xf32>
      %39 = tpu.matmul %37, %38, %cst_30 {dimension_numbers = #tpu.dot_dimension_numbers<[1], [0], [0], [1], [0, 0, 1, 1], [], []>} : vector<8x128xf32>, vector<128x128xf32>, vector<8x128xf32> -> vector<8x128xf32>
      %c0_31 = arith.constant 0 : index
      %c0_32 = arith.constant 0 : index
      %40 = vector.load %arg8[%c0_31, %c0_32] : memref<8x128xf32, #tpu.memory_space<vmem>>, vector<8x128xf32>
      tpu.vector_store %arg8[%c0_31, %c0_32], %39 {strides = array<i32>} : memref<8x128xf32, #tpu.memory_space<vmem>>, vector<8x128xf32>,
      %cst_33 = arith.constant 0xFF800000 : f32
      %41 = vector.broadcast %cst_33 : f32 to vector<8x1xf32>
      %c0_34 = arith.constant 0 : index
      %c0_35 = arith.constant 0 : index
      %42 = vector.load %arg9[%c0_34, %c0_35] : memref<8x1xf32, #tpu.memory_space<vmem>>, vector<8x1xf32>
      tpu.vector_store %arg9[%c0_34, %c0_35], %41 {strides = array<i32>} : memref<8x1xf32, #tpu.memory_space<vmem>>, vector<8x1xf32>,
      %cst_36 = arith.constant 0.000000e+00 : f32
      %43 = vector.broadcast %cst_36 : f32 to vector<8x1xf32>
      %c0_37 = arith.constant 0 : index
      %c0_38 = arith.constant 0 : index
      %44 = vector.load %arg10[%c0_37, %c0_38] : memref<8x1xf32, #tpu.memory_space<vmem>>, vector<8x1xf32>
      tpu.vector_store %arg10[%c0_37, %c0_38], %43 {strides = array<i32>} : memref<8x1xf32, #tpu.memory_space<vmem>>, vector<8x1xf32>,
      %cst_39 = arith.constant 0.000000e+00 : f32
      %45 = vector.broadcast %cst_39 : f32 to vector<8x128xf32>
      %c0_40 = arith.constant 0 : index
      %c0_41 = arith.constant 0 : index
      %46 = vector.load %arg11[%c0_40, %c0_41] : memref<8x128xf32, #tpu.memory_space<vmem>>, vector<8x128xf32>
      tpu.vector_store %arg11[%c0_40, %c0_41], %45 {strides = array<i32>} : memref<8x128xf32, #tpu.memory_space<vmem>>, vector<8x128xf32>,
    } else {
    }
    %c0 = arith.constant 0 : index
    %c0_1 = arith.constant 0 : index
    %c0_2 = arith.constant 0 : index
    %3 = vector.load %arg4[%c0, %c0_1, %c0_2] : memref<1x8x128xf32, #tpu.memory_space<vmem>>, vector<1x8x128xf32>
    %4 = vector.shape_cast %3 : vector<1x8x128xf32> to vector<8x128xf32>
    %c0_3 = arith.constant 0 : index
    %c0_4 = arith.constant 0 : index
    %5 = vector.load %arg6[%c0_3, %c0_4] : memref<128x256xf32, #tpu.memory_space<vmem>>, vector<128x256xf32>
    %cst = arith.constant dense<0.000000e+00> : vector<8x256xf32>
    %6 = tpu.matmul %4, %5, %cst {dimension_numbers = #tpu.dot_dimension_numbers<[1], [0], [0], [1], [0, 0, 1, 1], [], []>} : vector<8x128xf32>, vector<128x256xf32>, vector<8x256xf32> -> vector<8x256xf32>
    %7 = vector.extract_strided_slice %6 {offsets = [0, 0], sizes = [8, 128], strides = [1, 1]} : vector<8x256xf32> to vector<8x128xf32>
    %8 = vector.extract_strided_slice %6 {offsets = [0, 128], sizes = [8, 128], strides = [1, 1]} : vector<8x256xf32> to vector<8x128xf32>
    %c0_5 = arith.constant 0 : index
    %c0_6 = arith.constant 0 : index
    %9 = vector.load %arg8[%c0_5, %c0_6] : memref<8x128xf32, #tpu.memory_space<vmem>>, vector<8x128xf32>
    %cst_7 = arith.constant dense<0.000000e+00> : vector<8x8xf32>
    %10 = tpu.matmul %9, %7, %cst_7 {dimension_numbers = #tpu.dot_dimension_numbers<[1], [1], [0], [0], [0, 0, 1, 0], [], []>} : vector<8x128xf32>, vector<8x128xf32>, vector<8x8xf32> -> vector<8x8xf32>
    %c0_8 = arith.constant 0 : index
    %c0_9 = arith.constant 0 : index
    %11 = vector.load %arg9[%c0_8, %c0_9] : memref<8x1xf32, #tpu.memory_space<vmem>>, vector<8x1xf32>
    %cst_10 = arith.constant dense<0xFF800000> : vector<8xf32>
    %12 = vector.multi_reduction <maximumf>, %10, %cst_10 [1] : vector<8x8xf32> to vector<8xf32>
    %13 = vector.shape_cast %12 : vector<8xf32> to vector<8x1xf32>
    %14 = arith.maximumf %11, %13 : vector<8x1xf32>
    %15 = arith.subf %11, %14 : vector<8x1xf32>
    %16 = math.exp %15 : vector<8x1xf32>
    %17 = vector.broadcast %14 : vector<8x1xf32> to vector<8x8xf32>
    %18 = arith.subf %10, %17 : vector<8x8xf32>
    %19 = math.exp %18 : vector<8x8xf32>
    %c0_11 = arith.constant 0 : index
    %c0_12 = arith.constant 0 : index
    %20 = vector.load %arg10[%c0_11, %c0_12] : memref<8x1xf32, #tpu.memory_space<vmem>>, vector<8x1xf32>
    %21 = arith.mulf %16, %20 : vector<8x1xf32>
    %cst_13 = arith.constant dense<0.000000e+00> : vector<8xf32>
    %22 = vector.multi_reduction <add>, %19, %cst_13 [1] : vector<8x8xf32> to vector<8xf32>
    %23 = vector.shape_cast %22 : vector<8xf32> to vector<8x1xf32>
    %24 = arith.addf %21, %23 : vector<8x1xf32>
    %c0_14 = arith.constant 0 : index
    %c0_15 = arith.constant 0 : index
    %25 = vector.load %arg10[%c0_14, %c0_15] : memref<8x1xf32, #tpu.memory_space<vmem>>, vector<8x1xf32>
    tpu.vector_store %arg10[%c0_14, %c0_15], %24 {strides = array<i32>} : memref<8x1xf32, #tpu.memory_space<vmem>>, vector<8x1xf32>,
    %c0_16 = arith.constant 0 : index
    %c0_17 = arith.constant 0 : index
    %26 = vector.load %arg11[%c0_16, %c0_17] : memref<8x128xf32, #tpu.memory_space<vmem>>, vector<8x128xf32>
    %27 = vector.broadcast %16 : vector<8x1xf32> to vector<8x128xf32>
    %28 = arith.mulf %27, %26 : vector<8x128xf32>
    %cst_18 = arith.constant dense<0.000000e+00> : vector<8x128xf32>
    %29 = tpu.matmul %19, %8, %cst_18 {dimension_numbers = #tpu.dot_dimension_numbers<[1], [0], [0], [1], [0, 0, 1, 1], [], []>} : vector<8x8xf32>, vector<8x128xf32>, vector<8x128xf32> -> vector<8x128xf32>
    %30 = arith.addf %28, %29 : vector<8x128xf32>
    %c0_19 = arith.constant 0 : index
    %c0_20 = arith.constant 0 : index
    %31 = vector.load %arg11[%c0_19, %c0_20] : memref<8x128xf32, #tpu.memory_space<vmem>>, vector<8x128xf32>
    tpu.vector_store %arg11[%c0_19, %c0_20], %30 {strides = array<i32>} : memref<8x128xf32, #tpu.memory_space<vmem>>, vector<8x128xf32>,
    %c0_21 = arith.constant 0 : index
    %c0_22 = arith.constant 0 : index
    %32 = vector.load %arg9[%c0_21, %c0_22] : memref<8x1xf32, #tpu.memory_space<vmem>>, vector<8x1xf32>
    tpu.vector_store %arg9[%c0_21, %c0_22], %14 {strides = array<i32>} : memref<8x1xf32, #tpu.memory_space<vmem>>, vector<8x1xf32>,
    %c0_i32_23 = arith.constant 0 : i32
    %33 = arith.cmpi eq, %arg2, %c0_i32_23 : i32
    %34 = arith.extui %33 : i1 to i32
    %c0_i32_24 = arith.constant 0 : i32
    %35 = arith.cmpi ne, %34, %c0_i32_24 : i32
    scf.if %35 {
      %c0_25 = arith.constant 0 : index
      %c0_26 = arith.constant 0 : index
      %36 = vector.load %arg10[%c0_25, %c0_26] : memref<8x1xf32, #tpu.memory_space<vmem>>, vector<8x1xf32>
      %37 = tpu.reciprocal %36 {approx = true} : vector<8x1xf32> -> vector<8x1xf32>
      %c0_27 = arith.constant 0 : index
      %c0_28 = arith.constant 0 : index
      %38 = vector.load %arg11[%c0_27, %c0_28] : memref<8x128xf32, #tpu.memory_space<vmem>>, vector<8x128xf32>
      %39 = vector.broadcast %37 : vector<8x1xf32> to vector<8x128xf32>
      %40 = arith.mulf %38, %39 : vector<8x128xf32>
      %c0_29 = arith.constant 0 : index
      %c0_30 = arith.constant 0 : index
      %c0_31 = arith.constant 0 : index
      %41 = vector.load %arg7[%c0_29, %c0_30, %c0_31] : memref<1x8x128xf32, #tpu.memory_space<vmem>>, vector<1x8x128xf32>
      %42 = vector.shape_cast %41 : vector<1x8x128xf32> to vector<8x128xf32>
      %43 = vector.shape_cast %40 : vector<8x128xf32> to vector<1x8x128xf32>
      tpu.vector_store %arg7[%c0_29, %c0_30, %c0_31], %43 {strides = array<i32>} : memref<1x8x128xf32, #tpu.memory_space<vmem>>, vector<1x8x128xf32>,
    } else {
    }
    return
  }
  func.func @transform_0(%arg0: i32, %arg1: i32, %arg2: i32) -> (i32, i32, i32) {
    %c0_i32 = arith.constant 0 : i32
    %c0_i32_0 = arith.constant 0 : i32
    return %arg0, %arg1, %c0_i32 : i32, i32, i32
  }
  func.func @transform_1(%arg0: i32, %arg1: i32, %arg2: i32) -> (i32, i32, i32) {
    %c0_i32 = arith.constant 0 : i32
    %c0_i32_0 = arith.constant 0 : i32
    return %arg0, %arg2, %c0_i32 : i32, i32, i32
  }
  func.func @transform_2(%arg0: i32, %arg1: i32, %arg2: i32) -> (i32, i32) {
    %c0_i32 = arith.constant 0 : i32
    %c0_i32_0 = arith.constant 0 : i32
    %c0_i32_1 = arith.constant 0 : i32
    return %c0_i32, %c0_i32_0 : i32, i32
  }
  func.func @transform_3(%arg0: i32, %arg1: i32, %arg2: i32) -> (i32, i32) {
    %c0_i32 = arith.constant 0 : i32
    %c0_i32_0 = arith.constant 0 : i32
    %c0_i32_1 = arith.constant 0 : i32
    return %c0_i32, %c0_i32_0 : i32, i32
  }
  func.func @transform_4(%arg0: i32, %arg1: i32, %arg2: i32) -> (i32, i32, i32) {
    %c0_i32 = arith.constant 0 : i32
    %c0_i32_0 = arith.constant 0 : i32
    return %arg0, %arg1, %c0_i32 : i32, i32, i32
  }
}

</mosaic_0001>

<llo_original>
// kernel: tpu_custom_call.1
$region0: #{tpu_custom_call.1}
  #allocation0 [shape = 'u32[]', space=smem, size = 0x4, offset = 0x4, fixed_abs, tag = 'smem constant byte address 0x4 - core index']
  #allocation1 [shape = 'u32[144,128]{1,0:T(1,128)}', space=vmem, size = 0x12000, scoped, tag = 'internal scratch']
  #allocation2 [shape = 'f32[8,128]{1,0:T(8,128)}', space=vmem, size = 0x1000, scoped, tag = 'scratch operand']
  #allocation3 [shape = 'f32[8,1]{1,0:T(8,128)}', space=vmem, size = 0x1000, scoped, tag = 'scratch operand']
  #allocation4 [shape = 'f32[8,1]{1,0:T(8,128)}', space=vmem, size = 0x1000, scoped, tag = 'scratch operand']
  #allocation5 [shape = 'f32[8,128]{1,0:T(8,128)}', space=vmem, size = 0x1000, scoped, tag = 'scratch operand']
  %s0 = inlined_call_operand.hbm [shape: f32[2,8,128], index: 0, kind: input, shape index: {}]
  %s1 = inlined_call_operand.hbm [shape: f32[2,8,128], index: 1, kind: input, shape index: {}]
  %s2 = inlined_call_operand.hbm [shape: f32[128,128], index: 2, kind: input, shape index: {}]
  %s3 = inlined_call_operand.hbm [shape: f32[128,256], index: 3, kind: input, shape index: {}]
  %s4 = inlined_call_operand.hbm [shape: f32[2,8,128], index: 4, kind: output, shape index: {}]
  %s5 = sld [smem:[#allocation0]]
  $region73: #{tpu_custom_call.1} parent=0
    _
  %s7 = ssub.s32 1, %s5
  %s8 = scalar_select 0, %s7, %s5
  $region1: #{tpu_custom_call.1} parent=0
    #allocation6 [shape = 'u8[8192]{0}', space=vmem, size = 0x2000, scoped, tag = 'input window, operand 0']
    #allocation7 [shape = 's32[2]{0}', space=sflag, size = 0x8, scoped, tag = 'scoped memory for tpu_custom_call.1']
    #allocation8 [shape = 's32[2]{0}', space=sflag, size = 0x8, scoped, tag = 'scoped memory for tpu_custom_call.1']
    #allocation9 [shape = 'u8[8192]{0}', space=vmem, size = 0x2000, scoped, tag = 'input window, operand 1']
    #allocation10 [shape = 's32[2]{0}', space=sflag, size = 0x8, scoped, tag = 'scoped memory for tpu_custom_call.1']
    #allocation11 [shape = 'u8[65536]{0}', space=vmem, size = 0x10000, scoped, tag = 'input window, operand 2, single buffered']
    #allocation12 [shape = 'u8[131072]{0}', space=vmem, size = 0x20000, scoped, tag = 'input window, operand 3, single buffered']
    #allocation13 [shape = 's32[1]{0}', space=sflag, size = 0x4, scoped, tag = 'scoped memory for tpu_custom_call.1']
    #allocation14 [shape = 'u8[8192]{0}', space=vmem, size = 0x2000, scoped, tag = 'output window, operand 0']
    %9 = vsyncpa [#allocation7], 0
    %s10 = scalar_lea.sflag [#allocation7], 1
    %11 = vsyncpa %s10, 0
    %12 = vsyncpa [#allocation10], 0
    %s13 = scalar_lea.sflag [#allocation10], 1
    %14 = vsyncpa %s13, 0
    %15 = vsyncpa [#allocation13], 0
    %16 = vsyncpa [#allocation8], 0
    %s17 = scalar_lea.sflag [#allocation8], 1
    %18 = vsyncpa %s17, 0
    loop: start=0, step=1, limit=4
    $region2: #{tpu_custom_call.1} parent=1 // loop_pre_header
      _
    $region3: #{tpu_custom_call.1} parent=1 // loop_header
      %s20 = sphi 0, %s24
      %p21 = scmp.ge.s32.totalorder %s20, 4
      %s27 = sphi 0, %s46
      %s28 = sphi 0, %s42
      %s29 = sphi 0, %s38
      %s30 = sphi 0, %s27
      %s31 = sphi 0, %s28
      %s32 = sphi 0, %s29
      %s33 = sphi 0, %s30
      %s34 = sphi 0, %s31
      %s35 = sphi 0, %s32
      %s51 = sphi 0, %s53
      %s54 = sphi 0, %s51
      %s55 = sphi 0, %s54
      %s71 = sphi 0, %s55
      %s79 = sphi 0, %s81
      %s82 = sphi 0, %s79
      %s83 = sphi 0, %s82
      %s99 = sphi 0, %s83
      %s103 = sphi 0, %s103
      %s105 = sphi 0, %s103
      %s106 = sphi 0, %s105
      %s120 = sphi 0, %s106
      %s124 = sphi 0, %s124
      %s126 = sphi 0, %s124
      %s127 = sphi 0, %s126
      %s141 = sphi 0, %s127
      %s149 = sphi 0, %s151
      %s152 = sphi 0, %s149
      %s153 = sphi 0, %s152
      %s169 = sphi 0, %s153
    $region4: #{tpu_custom_call.1} parent=1 // loop_header_branch
      %23 = sbr.rel (%p21) target = $region8
    $region5: #{tpu_custom_call.1} parent=1 // loop_body
      %s25 = ssub.s32 %s20, 1
      %s26 = ssub.s32 %s20, 2
      %s36 = sadd.s32 1, %s29
      %p37 = scmp.ge.s32.totalorder %s36, 1
      %s38 = scalar_select %p37, 0, %s36
      %s39 = sadd.s32 1, %s28
      %s40 = scalar_select %p37, %s39, %s28
      %p41 = scmp.ge.s32.totalorder %s40, 1
      %s42 = scalar_select %p41, 0, %s40
      %s43 = sadd.s32 1, %s27
      %s44 = scalar_select %p41, %s43, %s27
      %p45 = scmp.ge.s32.totalorder %s44, 2
      %s46 = scalar_select %p45, 0, %s44
      %s47 = ssub.s32 %s27, %s46
      %s48 = ssub.s32 %s28, %s42
      %s49 = sor.u32 %s47, %s48
      %p50 = scmp.eq.s32.totalorder %s49, 0
      %s52 = sadd.s32 %s51, 1
      %s53 = scalar_select %p50, %s51, %s52
      %p56 = pneg %p50
      %p57 = scmp.eq.s32.totalorder %s20, 1
      %p58 = por %p56, %p57
      %p59 = scmp.ne.s32.totalorder %s51, %s54
      %p60 = scmp.eq.s32.totalorder %s20, 0
      %p61 = por %p59, %p60
      %p62 = scmp.ne.s32.totalorder %s51, %s54
      %p63 = scmp.eq.s32.totalorder %s25, 1
      %p64 = por %p62, %p63
      %p65 = scmp.ne.s32.totalorder %s54, %s55
      %p66 = scmp.eq.s32.totalorder %s25, 0
      %p67 = por %p65, %p66
      %p68 = scmp.ne.s32.totalorder %s54, %s55
      %p69 = scmp.eq.s32.totalorder %s26, 1
      %p70 = por %p68, %p69
      %p72 = scmp.ne.s32.totalorder %s55, %s71
      %p73 = scmp.eq.s32.totalorder %s26, 0
      %p74 = por %p72, %p73
      %s75 = ssub.s32 %s27, %s46
      %s76 = ssub.s32 %s29, %s38
      %s77 = sor.u32 %s75, %s76
      %p78 = scmp.eq.s32.totalorder %s77, 0
      %s80 = sadd.s32 %s79, 1
      %s81 = scalar_select %p78, %s79, %s80
      %p84 = pneg %p78
      %p85 = scmp.eq.s32.totalorder %s20, 1
      %p86 = por %p84, %p85
      %p87 = scmp.ne.s32.totalorder %s79, %s82
      %p88 = scmp.eq.s32.totalorder %s20, 0
      %p89 = por %p87, %p88
      %p90 = scmp.ne.s32.totalorder %s79, %s82
      %p91 = scmp.eq.s32.totalorder %s25, 1
      %p92 = por %p90, %p91
      %p93 = scmp.ne.s32.totalorder %s82, %s83
      %p94 = scmp.eq.s32.totalorder %s25, 0
      %p95 = por %p93, %p94
      %p96 = scmp.ne.s32.totalorder %s82, %s83
      %p97 = scmp.eq.s32.totalorder %s26, 1
      %p98 = por %p96, %p97
      %p100 = scmp.ne.s32.totalorder %s83, %s99
      %p101 = scmp.eq.s32.totalorder %s26, 0
      %p102 = por %p100, %p101
      %s104 = sadd.s32 %s103, 1
      %p107 = scmp.eq.s32.totalorder %s20, 1
      %p108 = scmp.ne.s32.totalorder %s103, %s105
      %p109 = scmp.eq.s32.totalorder %s20, 0
      %p110 = por %p108, %p109
      %p111 = scmp.ne.s32.totalorder %s103, %s105
      %p112 = scmp.eq.s32.totalorder %s25, 1
      %p113 = por %p111, %p112
      %p114 = scmp.ne.s32.totalorder %s105, %s106
      %p115 = scmp.eq.s32.totalorder %s25, 0
      %p116 = por %p114, %p115
      %p117 = scmp.ne.s32.totalorder %s105, %s106
      %p118 = scmp.eq.s32.totalorder %s26, 1
      %p119 = por %p117, %p118
      %p121 = scmp.ne.s32.totalorder %s106, %s120
      %p122 = scmp.eq.s32.totalorder %s26, 0
      %p123 = por %p121, %p122
      %s125 = sadd.s32 %s124, 1
      %p128 = scmp.eq.s32.totalorder %s20, 1
      %p129 = scmp.ne.s32.totalorder %s124, %s126
      %p130 = scmp.eq.s32.totalorder %s20, 0
      %p131 = por %p129, %p130
      %p132 = scmp.ne.s32.totalorder %s124, %s126
      %p133 = scmp.eq.s32.totalorder %s25, 1
      %p134 = por %p132, %p133
      %p135 = scmp.ne.s32.totalorder %s126, %s127
      %p136 = scmp.eq.s32.totalorder %s25, 0
      %p137 = por %p135, %p136
      %p138 = scmp.ne.s32.totalorder %s126, %s127
      %p139 = scmp.eq.s32.totalorder %s26, 1
      %p140 = por %p138, %p139
      %p142 = scmp.ne.s32.totalorder %s127, %s141
      %p143 = scmp.eq.s32.totalorder %s26, 0
      %p144 = por %p142, %p143
      %s145 = ssub.s32 %s27, %s46
      %s146 = ssub.s32 %s28, %s42
      %s147 = sor.u32 %s145, %s146
      %p148 = scmp.eq.s32.totalorder %s147, 0
      %s150 = sadd.s32 %s149, 1
      %s151 = scalar_select %p148, %s149, %s150
      %p154 = pneg %p148
      %p155 = scmp.eq.s32.totalorder %s20, 1
      %p156 = por %p154, %p155
      %p157 = scmp.ne.s32.totalorder %s149, %s152
      %p158 = scmp.eq.s32.totalorder %s20, 0
      %p159 = por %p157, %p158
      %p160 = scmp.ne.s32.totalorder %s149, %s152
      %p161 = scmp.eq.s32.totalorder %s25, 1
      %p162 = por %p160, %p161
      %p163 = scmp.ne.s32.totalorder %s152, %s153
      %p164 = scmp.eq.s32.totalorder %s25, 0
      %p165 = por %p163, %p164
      %p166 = scmp.ne.s32.totalorder %s152, %s153
      %p167 = scmp.eq.s32.totalorder %s26, 1
      %p168 = por %p166, %p167
      %p170 = scmp.ne.s32.totalorder %s153, %s169
      %p171 = scmp.eq.s32.totalorder %s26, 0
      %p172 = por %p170, %p171
      %p173 = scmp.le.s32.totalorder 1, %s20
      %p174 = scmp.lt.s32.totalorder %s20, 3
      %p175 = pnand %p173, %p174
      %p176 = pneg %p175
      // Predicated region
      $region9: #{tpu_custom_call.1} parent=5 // pred_check
        _
      $region10: #{tpu_custom_call.1} parent=5 // pred_check_branch
        %178 = sbr.rel (%p175) target = $region12
      $region11: #{tpu_custom_call.1} parent=5 // pred_region
        %s179 = ssub.s32 %s20, 1
        // Predicated region
        $region13: #{tpu_custom_call.1} parent=11 // pred_check
          %p180 = pneg %p116
        $region14: #{tpu_custom_call.1} parent=11 // pred_check_branch
          %182 = sbr.rel (%p180) target = $region16
        $region15: #{tpu_custom_call.1} parent=11 // pred_region
          %s184 = ssub.s32 2048, 2048
          %185 = vsyncadd [#allocation10], %s184
          %s186 = sshll.u32 [#allocation11], 4
          %s187 = int_to_ptr.vmem [resolvable:$true] %s186
          %192 = dma.hbm_to_vmem [thread:$0]  %s2, 2048, %s187, [#allocation10], 128, 128, 8
        $region16: #{tpu_custom_call.1} parent=11 // pred_fallthru
          _
        // Predicated region
        $region17: #{tpu_custom_call.1} parent=11 // pred_check
          %p193 = pneg %p137
        $region18: #{tpu_custom_call.1} parent=11 // pred_check_branch
          %195 = sbr.rel (%p193) target = $region20
        $region19: #{tpu_custom_call.1} parent=11 // pred_region
          %s197 = ssub.s32 4096, 4096
          %198 = vsyncadd [#allocation13], %s197
          %s199 = sshll.u32 [#allocation12], 4
          %s200 = int_to_ptr.vmem [resolvable:$true] %s199
          %205 = dma.hbm_to_vmem [thread:$0]  %s3, 4096, %s200, [#allocation13], 256, 256, 16
        $region20: #{tpu_custom_call.1} parent=11 // pred_fallthru
          _
      $region12: #{tpu_custom_call.1} parent=5 // pred_fallthru
        _
      %p206 = scmp.lt.s32.totalorder %s20, 2
      // Predicated region
      $region21: #{tpu_custom_call.1} parent=5 // pred_check
        %p207 = pneg %p206
      $region22: #{tpu_custom_call.1} parent=5 // pred_check_branch
        %209 = sbr.rel (%p207) target = $region24
      $region23: #{tpu_custom_call.1} parent=5 // pred_region
        // Predicated region
        $region25: #{tpu_custom_call.1} parent=23 // pred_check
          %p210 = pneg %p61
        $region26: #{tpu_custom_call.1} parent=23 // pred_check_branch
          %212 = sbr.rel (%p210) target = $region28
        $region27: #{tpu_custom_call.1} parent=23 // pred_region
          %s213 = sand.u32 %s51, 1
          %s214 = scalar_lea.sflag [#allocation7], %s213
          %s215 = sand.u32 %s51, 1
          %s216 = smul.addr %s215, 8
          %s217 = scalar_lea.vmem [#allocation6], %s216
          %s219 = ssub.s32 128, 128
          %220 = vsyncadd %s214, %s219
          %s221 = sadd.s32 %s28, %s27
          %s222 = smul.addr %s221, 128
          %s223 = scalar_lea.hbm %s0, %s222
          %s225 = sshll.u32 %s217, 4
          %s226 = int_to_ptr.vmem [resolvable:$true] %s225
          %228 = dma.hbm_to_vmem [thread:$0]  %s223, 128, %s226, %s214
        $region28: #{tpu_custom_call.1} parent=23 // pred_fallthru
          _
        // Predicated region
        $region29: #{tpu_custom_call.1} parent=23 // pred_check
          %p229 = pneg %p89
        $region30: #{tpu_custom_call.1} parent=23 // pred_check_branch
          %231 = sbr.rel (%p229) target = $region32
        $region31: #{tpu_custom_call.1} parent=23 // pred_region
          %s232 = sand.u32 %s20, 1
          %s233 = scalar_lea.sflag [#allocation10], %s232
          %s234 = sand.u32 %s79, 1
          %s235 = smul.addr %s234, 8
          %s236 = scalar_lea.vmem [#allocation9], %s235
          %s238 = ssub.s32 128, 128
          %239 = vsyncadd %s233, %s238
          %s240 = sadd.s32 %s29, %s27
          %s241 = smul.addr %s240, 128
          %s242 = scalar_lea.hbm %s1, %s241
          %s244 = sshll.u32 %s236, 4
          %s245 = int_to_ptr.vmem [resolvable:$true] %s244
          %247 = dma.hbm_to_vmem [thread:$0]  %s242, 128, %s245, %s233
        $region32: #{tpu_custom_call.1} parent=23 // pred_fallthru
          _
      $region24: #{tpu_custom_call.1} parent=5 // pred_fallthru
        _
      %p248 = scmp.le.s32.totalorder 1, %s20
      %p249 = scmp.lt.s32.totalorder %s20, 3
      %p250 = pnand %p248, %p249
      %p251 = pneg %p250
      // Predicated region
      $region33: #{tpu_custom_call.1} parent=5 // pred_check
        _
      $region34: #{tpu_custom_call.1} parent=5 // pred_check_branch
        %253 = sbr.rel (%p250) target = $region36
      $region35: #{tpu_custom_call.1} parent=5 // pred_region
        %s254 = ssub.s32 %s20, 1
        %s255 = sand.u32 %s54, 1
        %s256 = scalar_lea.sflag [#allocation7], %s255
        %s257 = sand.u32 %s54, 1
        %s258 = smul.addr %s257, 8
        %s259 = scalar_lea.vmem [#allocation6], %s258
        // Predicated region
        $region37: #{tpu_custom_call.1} parent=35 // pred_check
          %p260 = pneg %p67
        $region38: #{tpu_custom_call.1} parent=35 // pred_check_branch
          %262 = sbr.rel (%p260) target = $region40
        $region39: #{tpu_custom_call.1} parent=35 // pred_region
          %263 = dma.done %s256, 128
        $region40: #{tpu_custom_call.1} parent=35 // pred_fallthru
          _
        %s264 = sand.u32 %s25, 1
        %s265 = scalar_lea.sflag [#allocation10], %s264
        %s266 = sand.u32 %s82, 1
        %s267 = smul.addr %s266, 8
        %s268 = scalar_lea.vmem [#allocation9], %s267
        // Predicated region
        $region41: #{tpu_custom_call.1} parent=35 // pred_check
          %p269 = pneg %p95
        $region42: #{tpu_custom_call.1} parent=35 // pred_check_branch
          %271 = sbr.rel (%p269) target = $region44
        $region43: #{tpu_custom_call.1} parent=35 // pred_region
          %272 = dma.done %s265, 128
        $region44: #{tpu_custom_call.1} parent=35 // pred_fallthru
          _
        // Predicated region
        $region45: #{tpu_custom_call.1} parent=35 // pred_check
          %p273 = pneg %p116
        $region46: #{tpu_custom_call.1} parent=35 // pred_check_branch
          %275 = sbr.rel (%p273) target = $region48
        $region47: #{tpu_custom_call.1} parent=35 // pred_region
          %276 = dma.done [#allocation10], 2048
        $region48: #{tpu_custom_call.1} parent=35 // pred_fallthru
          _
        // Predicated region
        $region49: #{tpu_custom_call.1} parent=35 // pred_check
          %p277 = pneg %p137
        $region50: #{tpu_custom_call.1} parent=35 // pred_check_branch
          %279 = sbr.rel (%p277) target = $region52
        $region51: #{tpu_custom_call.1} parent=35 // pred_region
          %280 = dma.done [#allocation13], 4096
        $region52: #{tpu_custom_call.1} parent=35 // pred_fallthru
          _
        %s281 = sand.u32 %s54, 1
        %s282 = scalar_lea.sflag [#allocation7], %s281
        %s283 = sand.u32 %s54, 1
        %s284 = smul.addr %s283, 8
        %s285 = scalar_lea.vmem [#allocation6], %s284
        %p286 = pneg %p67
        %p287 = pneg %p64
        %s288 = sand.u32 %s25, 1
        %s289 = scalar_lea.sflag [#allocation10], %s288
        %s290 = sand.u32 %s82, 1
        %s291 = smul.addr %s290, 8
        %s292 = scalar_lea.vmem [#allocation9], %s291
        %p293 = pneg %p95
        %p294 = pneg %p92
        %p295 = pneg %p116
        %p296 = pneg %p113
        %p297 = pneg %p137
        %p298 = pneg %p134
        %p299 = pneg %p165
        %p300 = pneg %p162
        %s301 = sand.u32 %s152, 1
        %s302 = scalar_lea.sflag [#allocation8], %s301
        %s303 = sand.u32 %s152, 1
        %s304 = smul.addr %s303, 8
        %s305 = scalar_lea.vmem [#allocation14], %s304
        %p306 = scmp.eq.s32.totalorder %s32, 0
        // Predicated region
        $region53: #{tpu_custom_call.1} parent=35 // pred_check
          %p307 = pneg %p306
        $region54: #{tpu_custom_call.1} parent=35 // pred_check_branch
          %309 = sbr.rel (%p307) target = $region56
        $region55: #{tpu_custom_call.1} parent=35 // pred_region
          %v310 = vld [vmem:[%s259] sm:$0xff]
          %v311 = vld [vmem:[#allocation11] sm:$0xff]
          %v312 = vld [vmem:[#allocation11 + $0x8] sm:$0xff]
          %v313 = vld [vmem:[#allocation11 + $0x10] sm:$0xff]
          %v314 = vld [vmem:[#allocation11 + $0x18] sm:$0xff]
          %v315 = vld [vmem:[#allocation11 + $0x20] sm:$0xff]
          %v316 = vld [vmem:[#allocation11 + $0x28] sm:$0xff]
          %v317 = vld [vmem:[#allocation11 + $0x30] sm:$0xff]
          %v318 = vld [vmem:[#allocation11 + $0x38] sm:$0xff]
          %v319 = vld [vmem:[#allocation11 + $0x40] sm:$0xff]
          %v320 = vld [vmem:[#allocation11 + $0x48] sm:$0xff]
          %v321 = vld [vmem:[#allocation11 + $0x50] sm:$0xff]
          %v322 = vld [vmem:[#allocation11 + $0x58] sm:$0xff]
          %v323 = vld [vmem:[#allocation11 + $0x60] sm:$0xff]
          %v324 = vld [vmem:[#allocation11 + $0x68] sm:$0xff]
          %v325 = vld [vmem:[#allocation11 + $0x70] sm:$0xff]
          %v326 = vld [vmem:[#allocation11 + $0x78] sm:$0xff]
          %327 = vmatprep.subr.mxu0 0.0
          %328 = vmatpush1.msra.mxu0 %v311
          %329 = vmatprep.subr.mxu0 0.0
          %330 = vmatpush1.msra.mxu0 %v312
          %331 = vmatprep.subr.mxu0 0.0
          %332 = vmatpush1.msra.mxu0 %v313
          %333 = vmatprep.subr.mxu0 0.0
          %334 = vmatpush1.msra.mxu0 %v314
          %335 = vmatprep.subr.mxu0 0.0
          %336 = vmatpush1.msra.mxu0 %v315
          %337 = vmatprep.subr.mxu0 0.0
          %338 = vmatpush1.msra.mxu0 %v316
          %339 = vmatprep.subr.mxu0 0.0
          %340 = vmatpush1.msra.mxu0 %v317
          %341 = vmatprep.subr.mxu0 0.0
          %342 = vmatpush1.msra.mxu0 %v318
          %343 = vmatprep.subr.mxu0 0.0
          %344 = vmatpush1.msra.mxu0 %v319
          %345 = vmatprep.subr.mxu0 0.0
          %346 = vmatpush1.msra.mxu0 %v320
          %347 = vmatprep.subr.mxu0 0.0
          %348 = vmatpush1.msra.mxu0 %v321
          %349 = vmatprep.subr.mxu0 0.0
          %350 = vmatpush1.msra.mxu0 %v322
          %351 = vmatprep.subr.mxu0 0.0
          %352 = vmatpush1.msra.mxu0 %v323
          %353 = vmatprep.subr.mxu0 0.0
          %354 = vmatpush1.msra.mxu0 %v324
          %355 = vmatprep.subr.mxu0 0.0
          %356 = vmatpush1.msra.mxu0 %v325
          %357 = vmatprep.subr.mxu0 0.0
          %358 = vmatpush1.msra.mxu0 %v326
          %359 = vmatprep.subr.mxu0 0.0
          %360 = vmatpush1.msra.mxu0 0.0
          %361 = vmatprep.subr.mxu0 0.0
          %362 = vmatpush1.msra.mxu0 0.0
          %363 = vmatprep.subr.mxu0 0.0
          %364 = vmatpush1.msra.mxu0 0.0
          %365 = vmatprep.subr.mxu0 0.0
          %366 = vmatpush1.msra.mxu0 0.0
          %367 = vmatprep.subr.mxu0 0.0
          %368 = vmatpush1.msra.mxu0 0.0
          %369 = vmatprep.subr.mxu0 0.0
          %370 = vmatpush1.msra.mxu0 0.0
          %371 = vmatprep.subr.mxu0 0.0
          %372 = vmatpush1.msra.mxu0 0.0
          %373 = vmatprep.subr.mxu0 0.0
          %374 = vmatpush1.msra.mxu0 0.0
          %375 = vmatprep.subr.mxu0 0.0
          %376 = vmatpush1.msra.mxu0 0.0
          %377 = vmatprep.subr.mxu0 0.0
          %378 = vmatpush1.msra.mxu0 0.0
          %379 = vmatprep.subr.mxu0 0.0
          %380 = vmatpush1.msra.mxu0 0.0
          %381 = vmatprep.subr.mxu0 0.0
          %382 = vmatpush1.msra.mxu0 0.0
          %383 = vmatprep.subr.mxu0 0.0
          %384 = vmatpush1.msra.mxu0 0.0
          %385 = vmatprep.subr.mxu0 0.0
          %386 = vmatpush1.msra.mxu0 0.0
          %387 = vmatprep.subr.mxu0 0.0
          %388 = vmatpush1.msra.mxu0 0.0
          %389 = vmatprep.subr.mxu0 0.0
          %390 = vmatpush1.msra.mxu0 0.0
          %391 = vmatprep.mubr.f32.mxu0 0.0
          %392 = vmatmul.mubr.f32.gmra.mrb[0].mxu0 %v310
          %v393 = vpop.f32.mrb[0].mxu0
          %v394 = vadd.f32 0.0, %v393
          %v395 = vpop.f32.mrb[0].mxu0
          %396 = vdwg.mxu0
          %397 = vst [vmem:[#allocation2] sm:$0xff] %v394
          %vm398 = vcmask 7168
          %399 = vst.msk [vmem:[#allocation3] sm:$0xff] %vm398, -inf
          %400 = vst.msk [vmem:[#allocation4] sm:$0xff] %vm398, 0.0
          %401 = vst [vmem:[#allocation5] sm:$0xff] 0.0
        $region56: #{tpu_custom_call.1} parent=35 // pred_fallthru
          _
        %v402 = vld [vmem:[%s268] sm:$0xff]
        %v403 = vld [vmem:[#allocation12] sm:$0xff]
        %v404 = vld [vmem:[#allocation12 + $0x8] sm:$0xff]
        %v405 = vld [vmem:[#allocation12 + $0x10] sm:$0xff]
        %v406 = vld [vmem:[#allocation12 + $0x18] sm:$0xff]
        %v407 = vld [vmem:[#allocation12 + $0x20] sm:$0xff]
        %v408 = vld [vmem:[#allocation12 + $0x28] sm:$0xff]
        %v409 = vld [vmem:[#allocation12 + $0x30] sm:$0xff]
        %v410 = vld [vmem:[#allocation12 + $0x38] sm:$0xff]
        %v411 = vld [vmem:[#allocation12 + $0x40] sm:$0xff]
        %v412 = vld [vmem:[#allocation12 + $0x48] sm:$0xff]
        %v413 = vld [vmem:[#allocation12 + $0x50] sm:$0xff]
        %v414 = vld [vmem:[#allocation12 + $0x58] sm:$0xff]
        %v415 = vld [vmem:[#allocation12 + $0x60] sm:$0xff]
        %v416 = vld [vmem:[#allocation12 + $0x68] sm:$0xff]
        %v417 = vld [vmem:[#allocation12 + $0x70] sm:$0xff]
        %v418 = vld [vmem:[#allocation12 + $0x78] sm:$0xff]
        %v419 = vld [vmem:[#allocation12 + $0x80] sm:$0xff]
        %v420 = vld [vmem:[#allocation12 + $0x88] sm:$0xff]
        %v421 = vld [vmem:[#allocation12 + $0x90] sm:$0xff]
        %v422 = vld [vmem:[#allocation12 + $0x98] sm:$0xff]
        %v423 = vld [vmem:[#allocation12 + $0xa0] sm:$0xff]
        %v424 = vld [vmem:[#allocation12 + $0xa8] sm:$0xff]
        %v425 = vld [vmem:[#allocation12 + $0xb0] sm:$0xff]
        %v426 = vld [vmem:[#allocation12 + $0xb8] sm:$0xff]
        %v427 = vld [vmem:[#allocation12 + $0xc0] sm:$0xff]
        %v428 = vld [vmem:[#allocation12 + $0xc8] sm:$0xff]
        %v429 = vld [vmem:[#allocation12 + $0xd0] sm:$0xff]
        %v430 = vld [vmem:[#allocation12 + $0xd8] sm:$0xff]
        %v431 = vld [vmem:[#allocation12 + $0xe0] sm:$0xff]
        %v432 = vld [vmem:[#allocation12 + $0xe8] sm:$0xff]
        %v433 = vld [vmem:[#allocation12 + $0xf0] sm:$0xff]
        %v434 = vld [vmem:[#allocation12 + $0xf8] sm:$0xff]
        %435 = vmatprep.subr.mxu0 %v404
        %436 = vmatpush1.msra.mxu0 %v403
        %437 = vmatprep.subr.mxu0 %v406
        %438 = vmatpush1.msra.mxu0 %v405
        %439 = vmatprep.subr.mxu0 %v408
        %440 = vmatpush1.msra.mxu0 %v407
        %441 = vmatprep.subr.mxu0 %v410
        %442 = vmatpush1.msra.mxu0 %v409
        %443 = vmatprep.subr.mxu0 %v412
        %444 = vmatpush1.msra.mxu0 %v411
        %445 = vmatprep.subr.mxu0 %v414
        %446 = vmatpush1.msra.mxu0 %v413
        %447 = vmatprep.subr.mxu0 %v416
        %448 = vmatpush1.msra.mxu0 %v415
        %449 = vmatprep.subr.mxu0 %v418
        %450 = vmatpush1.msra.mxu0 %v417
        %451 = vmatprep.subr.mxu0 %v420
        %452 = vmatpush1.msra.mxu0 %v419
        %453 = vmatprep.subr.mxu0 %v422
        %454 = vmatpush1.msra.mxu0 %v421
        %455 = vmatprep.subr.mxu0 %v424
        %456 = vmatpush1.msra.mxu0 %v423
        %457 = vmatprep.subr.mxu0 %v426
        %458 = vmatpush1.msra.mxu0 %v425
        %459 = vmatprep.subr.mxu0 %v428
        %460 = vmatpush1.msra.mxu0 %v427
        %461 = vmatprep.subr.mxu0 %v430
        %462 = vmatpush1.msra.mxu0 %v429
        %463 = vmatprep.subr.mxu0 %v432
        %464 = vmatpush1.msra.mxu0 %v431
        %465 = vmatprep.subr.mxu0 %v434
        %466 = vmatpush1.msra.mxu0 %v433
        %467 = vmatprep.subr.mxu0 0.0
        %468 = vmatpush1.msra.mxu0 0.0
        %469 = vmatprep.subr.mxu0 0.0
        %470 = vmatpush1.msra.mxu0 0.0
        %471 = vmatprep.subr.mxu0 0.0
        %472 = vmatpush1.msra.mxu0 0.0
        %473 = vmatprep.subr.mxu0 0.0
        %474 = vmatpush1.msra.mxu0 0.0
        %475 = vmatprep.subr.mxu0 0.0
        %476 = vmatpush1.msra.mxu0 0.0
        %477 = vmatprep.subr.mxu0 0.0
        %478 = vmatpush1.msra.mxu0 0.0
        %479 = vmatprep.subr.mxu0 0.0
        %480 = vmatpush1.msra.mxu0 0.0
        %481 = vmatprep.subr.mxu0 0.0
        %482 = vmatpush1.msra.mxu0 0.0
        %483 = vmatprep.subr.mxu0 0.0
        %484 = vmatpush1.msra.mxu0 0.0
        %485 = vmatprep.subr.mxu0 0.0
        %486 = vmatpush1.msra.mxu0 0.0
        %487 = vmatprep.subr.mxu0 0.0
        %488 = vmatpush1.msra.mxu0 0.0
        %489 = vmatprep.subr.mxu0 0.0
        %490 = vmatpush1.msra.mxu0 0.0
        %491 = vmatprep.subr.mxu0 0.0
        %492 = vmatpush1.msra.mxu0 0.0
        %493 = vmatprep.subr.mxu0 0.0
        %494 = vmatpush1.msra.mxu0 0.0
        %495 = vmatprep.subr.mxu0 0.0
        %496 = vmatpush1.msra.mxu0 0.0
        %497 = vmatprep.subr.mxu0 0.0
        %498 = vmatpush1.msra.mxu0 0.0
        %499 = vmatprep.mubr.f32.mxu0 0.0
        %500 = vmatmul.mubr.f32.gmra.mrb[0].mxu0 %v402
        %v501 = vpop.f32.mrb[0].mxu0
        %v502 = vadd.f32 0.0, %v501
        %v503 = vpop.f32.mrb[0].mxu0
        %v504 = vadd.f32 0.0, %v503
        %505 = vdwg.mxu0
        %v506 = vld [vmem:[#allocation2] sm:$0xff]
        %507 = vmatprep.subr.mxu0 0.0
        %508 = vmatpush1.xpose.msra.mxu0 %v502
        %509 = vmatprep.subr.mxu0 0.0
        %510 = vmatpush1.xpose.msra.mxu0 0.0
        %511 = vmatprep.subr.mxu0 0.0
        %512 = vmatpush1.xpose.msra.mxu0 0.0
        %513 = vmatprep.subr.mxu0 0.0
        %514 = vmatpush1.xpose.msra.mxu0 0.0
        %515 = vmatprep.subr.mxu0 0.0
        %516 = vmatpush1.xpose.msra.mxu0 0.0
        %517 = vmatprep.subr.mxu0 0.0
        %518 = vmatpush1.xpose.msra.mxu0 0.0
        %519 = vmatprep.subr.mxu0 0.0
        %520 = vmatpush1.xpose.msra.mxu0 0.0
        %521 = vmatprep.subr.mxu0 0.0
        %522 = vmatpush1.xpose.msra.mxu0 0.0
        %523 = vmatprep.subr.mxu0 0.0
        %524 = vmatpush1.xpose.msra.mxu0 0.0
        %525 = vmatprep.subr.mxu0 0.0
        %526 = vmatpush1.xpose.msra.mxu0 0.0
        %527 = vmatprep.subr.mxu0 0.0
        %528 = vmatpush1.xpose.msra.mxu0 0.0
        %529 = vmatprep.subr.mxu0 0.0
        %530 = vmatpush1.xpose.msra.mxu0 0.0
        %531 = vmatprep.subr.mxu0 0.0
        %532 = vmatpush1.xpose.msra.mxu0 0.0
        %533 = vmatprep.subr.mxu0 0.0
        %534 = vmatpush1.xpose.msra.mxu0 0.0
        %535 = vmatprep.subr.mxu0 0.0
        %536 = vmatpush1.xpose.msra.mxu0 0.0
        %537 = vmatprep.subr.mxu0 0.0
        %538 = vmatpush1.xpose.msra.mxu0 0.0
        %539 = vmatprep.subr.mxu0 0.0
        %540 = vmatpush1.xpose.msra.mxu0 0.0
        %541 = vmatprep.subr.mxu0 0.0
        %542 = vmatpush1.xpose.msra.mxu0 0.0
        %543 = vmatprep.subr.mxu0 0.0
        %544 = vmatpush1.xpose.msra.mxu0 0.0
        %545 = vmatprep.subr.mxu0 0.0
        %546 = vmatpush1.xpose.msra.mxu0 0.0
        %547 = vmatprep.subr.mxu0 0.0
        %548 = vmatpush1.xpose.msra.mxu0 0.0
        %549 = vmatprep.subr.mxu0 0.0
        %550 = vmatpush1.xpose.msra.mxu0 0.0
        %551 = vmatprep.subr.mxu0 0.0
        %552 = vmatpush1.xpose.msra.mxu0 0.0
        %553 = vmatprep.subr.mxu0 0.0
        %554 = vmatpush1.xpose.msra.mxu0 0.0
        %555 = vmatprep.subr.mxu0 0.0
        %556 = vmatpush1.xpose.msra.mxu0 0.0
        %557 = vmatprep.subr.mxu0 0.0
        %558 = vmatpush1.xpose.msra.mxu0 0.0
        %559 = vmatprep.subr.mxu0 0.0
        %560 = vmatpush1.xpose.msra.mxu0 0.0
        %561 = vmatprep.subr.mxu0 0.0
        %562 = vmatpush1.xpose.msra.mxu0 0.0
        %563 = vmatprep.subr.mxu0 0.0
        %564 = vmatpush1.xpose.msra.mxu0 0.0
        %565 = vmatprep.subr.mxu0 0.0
        %566 = vmatpush1.xpose.msra.mxu0 0.0
        %567 = vmatprep.subr.mxu0 0.0
        %568 = vmatpush1.xpose.msra.mxu0 0.0
        %569 = vmatprep.subr.mxu0 0.0
        %570 = vmatpush1.xpose.msra.mxu0 0.0
        %571 = vmatprep.mubr.f32.mxu0 0.0
        %572 = vmatmul.mubr.f32.gmra.mrb[0].mxu0 %v506
        %v573 = vpop.f32.mrb[0].mxu0
        %v574 = vadd.f32 0.0, %v573
        %v575 = vpop.f32.mrb[0].mxu0
        %576 = vdwg.mxu0
        %v577 = vld [vmem:[#allocation3] sm:$0xff]
        %vm578 = vcmask 64512
        %v579 = vsel %vm578, %v574, -inf
        %580 = vmax.xlane.f32.xlu0 %v579
        %v581 = vpop.xlane.xlu0 %580
        %v582 = vmax.f32 %v577, %v581
        %v583 = vsub.f32 %v577, %v582
        %v584 = vmul.f32 %v583, 1.442695
        %v585 = vpow.pop %v584
        %587 = vset.pattern.permute.xlu0 0
        %588 = vperm.xlu0 %587, %v582
        %v589 = vpop.permute.xlu0 %588
        %v591 = vsub.f32 %v574, %v589
        %v592 = vmul.f32 %v591, 1.442695
        %v593 = vpow.pop %v592
        %v594 = vld [vmem:[#allocation4] sm:$0xff]
        %v595 = vmul.f32 %v585, %v594
        %v596 = vsel %vm578, %v593, 0.0
        %597 = vadd.xlane.f32.xlu0 %v596
        %v598 = vpop.xlane.xlu0 %597
        %v599 = vadd.f32 %v595, %v598
        %vm600 = vcmask 7168
        %601 = vst.msk [vmem:[#allocation4] sm:$0xff] %vm600, %v599
        %v602 = vld [vmem:[#allocation5] sm:$0xff]
        %604 = vset.pattern.permute.xlu0 0
        %605 = vperm.xlu0 %604, %v585
        %v606 = vpop.permute.xlu0 %605
        %v608 = vmul.f32 %v606, %v602
        %v610 = vsel %vm578, %v593, 0
        %612 = vmatprep.subr.mxu0 0.0
        %613 = vmatpush1.msra.mxu0 %v504
        %614 = vmatprep.subr.mxu0 0.0
        %615 = vmatpush1.msra.mxu0 0.0
        %616 = vmatprep.subr.mxu0 0.0
        %617 = vmatpush1.msra.mxu0 0.0
        %618 = vmatprep.subr.mxu0 0.0
        %619 = vmatpush1.msra.mxu0 0.0
        %620 = vmatprep.subr.mxu0 0.0
        %621 = vmatpush1.msra.mxu0 0.0
        %622 = vmatprep.subr.mxu0 0.0
        %623 = vmatpush1.msra.mxu0 0.0
        %624 = vmatprep.subr.mxu0 0.0
        %625 = vmatpush1.msra.mxu0 0.0
        %626 = vmatprep.subr.mxu0 0.0
        %627 = vmatpush1.msra.mxu0 0.0
        %628 = vmatprep.subr.mxu0 0.0
        %629 = vmatpush1.msra.mxu0 0.0
        %630 = vmatprep.subr.mxu0 0.0
        %631 = vmatpush1.msra.mxu0 0.0
        %632 = vmatprep.subr.mxu0 0.0
        %633 = vmatpush1.msra.mxu0 0.0
        %634 = vmatprep.subr.mxu0 0.0
        %635 = vmatpush1.msra.mxu0 0.0
        %636 = vmatprep.subr.mxu0 0.0
        %637 = vmatpush1.msra.mxu0 0.0
        %638 = vmatprep.subr.mxu0 0.0
        %639 = vmatpush1.msra.mxu0 0.0
        %640 = vmatprep.subr.mxu0 0.0
        %641 = vmatpush1.msra.mxu0 0.0
        %642 = vmatprep.subr.mxu0 0.0
        %643 = vmatpush1.msra.mxu0 0.0
        %644 = vmatprep.subr.mxu0 0.0
        %645 = vmatpush1.msra.mxu0 0.0
        %646 = vmatprep.subr.mxu0 0.0
        %647 = vmatpush1.msra.mxu0 0.0
        %648 = vmatprep.subr.mxu0 0.0
        %649 = vmatpush1.msra.mxu0 0.0
        %650 = vmatprep.subr.mxu0 0.0
        %651 = vmatpush1.msra.mxu0 0.0
        %652 = vmatprep.subr.mxu0 0.0
        %653 = vmatpush1.msra.mxu0 0.0
        %654 = vmatprep.subr.mxu0 0.0
        %655 = vmatpush1.msra.mxu0 0.0
        %656 = vmatprep.subr.mxu0 0.0
        %657 = vmatpush1.msra.mxu0 0.0
        %658 = vmatprep.subr.mxu0 0.0
        %659 = vmatpush1.msra.mxu0 0.0
        %660 = vmatprep.subr.mxu0 0.0
        %661 = vmatpush1.msra.mxu0 0.0
        %662 = vmatprep.subr.mxu0 0.0
        %663 = vmatpush1.msra.mxu0 0.0
        %664 = vmatprep.subr.mxu0 0.0
        %665 = vmatpush1.msra.mxu0 0.0
        %666 = vmatprep.subr.mxu0 0.0
        %667 = vmatpush1.msra.mxu0 0.0
        %668 = vmatprep.subr.mxu0 0.0
        %669 = vmatpush1.msra.mxu0 0.0
        %670 = vmatprep.subr.mxu0 0.0
        %671 = vmatpush1.msra.mxu0 0.0
        %672 = vmatprep.subr.mxu0 0.0
        %673 = vmatpush1.msra.mxu0 0.0
        %674 = vmatprep.subr.mxu0 0.0
        %675 = vmatpush1.msra.mxu0 0.0
        %676 = vmatprep.mubr.f32.mxu0 0.0
        %677 = vmatmul.mubr.f32.gmra.mrb[0].mxu0 %v610
        %v678 = vpop.f32.mrb[0].mxu0
        %v679 = vadd.f32 0.0, %v678
        %v680 = vpop.f32.mrb[0].mxu0
        %681 = vdwg.mxu0
        %v682 = vadd.f32 %v608, %v679
        %683 = vst [vmem:[#allocation5] sm:$0xff] %v682
        %684 = vst.msk [vmem:[#allocation3] sm:$0xff] %vm600, %v582
        // Predicated region
        $region57: #{tpu_custom_call.1} parent=35 // pred_check
          %p685 = pneg %p306
        $region58: #{tpu_custom_call.1} parent=35 // pred_check_branch
          %687 = sbr.rel (%p685) target = $region60
        $region59: #{tpu_custom_call.1} parent=35 // pred_region
          %v688 = vld [vmem:[#allocation4] sm:$0xff]
          %v689 = vrcp.pop %v688
          %v690 = vld [vmem:[#allocation5] sm:$0xff]
          %692 = vset.pattern.permute.xlu0 0
          %693 = vperm.xlu0 %692, %v689
          %v694 = vpop.permute.xlu0 %693
          %v696 = vmul.f32 %v690, %v694
          %697 = vst [vmem:[%s305] sm:$0xff] %v696
        $region60: #{tpu_custom_call.1} parent=35 // pred_fallthru
          _
        %s698 = sand.u32 %s152, 1
        %s699 = scalar_lea.sflag [#allocation8], %s698
        %s700 = sand.u32 %s152, 1
        %s701 = smul.addr %s700, 8
        %s702 = scalar_lea.vmem [#allocation14], %s701
        // Predicated region
        $region61: #{tpu_custom_call.1} parent=35 // pred_check
          %p703 = pneg %p162
        $region62: #{tpu_custom_call.1} parent=35 // pred_check_branch
          %705 = sbr.rel (%p703) target = $region64
        $region63: #{tpu_custom_call.1} parent=35 // pred_region
          %s707 = ssub.s32 128, 128
          %708 = vsyncadd %s699, %s707
          %s709 = sadd.s32 %s31, %s30
          %s710 = smul.addr %s709, 128
          %s711 = scalar_lea.hbm %s4, %s710
          %s713 = sshll.u32 %s702, 4
          %s714 = int_to_ptr.vmem [resolvable:$true] %s713
          %716 = dma.vmem_to_hbm [thread:$0]  %s714, 128, %s711, %s699
        $region64: #{tpu_custom_call.1} parent=35 // pred_fallthru
          _
      $region36: #{tpu_custom_call.1} parent=5 // pred_fallthru
        _
      %p717 = scmp.le.s32.totalorder 2, %s20
      // Predicated region
      $region65: #{tpu_custom_call.1} parent=5 // pred_check
        %p718 = pneg %p717
      $region66: #{tpu_custom_call.1} parent=5 // pred_check_branch
        %720 = sbr.rel (%p718) target = $region68
      $region67: #{tpu_custom_call.1} parent=5 // pred_region
        %s721 = ssub.s32 %s20, 2
        // Predicated region
        $region69: #{tpu_custom_call.1} parent=67 // pred_check
          %p722 = pneg %p168
        $region70: #{tpu_custom_call.1} parent=67 // pred_check_branch
          %724 = sbr.rel (%p722) target = $region72
        $region71: #{tpu_custom_call.1} parent=67 // pred_region
          %s725 = sand.u32 %s153, 1
          %s726 = scalar_lea.sflag [#allocation8], %s725
          %s727 = sand.u32 %s153, 1
          %s728 = smul.addr %s727, 8
          %s729 = scalar_lea.vmem [#allocation14], %s728
          %730 = dma.done %s726, 128
        $region72: #{tpu_custom_call.1} parent=67 // pred_fallthru
          _
      $region68: #{tpu_custom_call.1} parent=5 // pred_fallthru
        _
    $region6: #{tpu_custom_call.1} parent=1 // loop_footer
      %s24 = sadd.s32 1, %s20
    $region7: #{tpu_custom_call.1} parent=1 // loop_footer_branch
      %19 = sbr.rel target = $region3
    $region8: #{tpu_custom_call.1} parent=1 // loop_exit
      _
    %731 = vsyncpa [#allocation7], 1
    %s732 = scalar_lea.sflag [#allocation7], 1
    %733 = vsyncpa %s732, 1
    %734 = vsyncpa [#allocation10], 1
    %s735 = scalar_lea.sflag [#allocation10], 1
    %736 = vsyncpa %s735, 1
    %737 = vsyncpa [#allocation13], 1
    %738 = vsyncpa [#allocation8], 1
    %s739 = scalar_lea.sflag [#allocation8], 1
    %740 = vsyncpa %s739, 1

</llo_original>
